<compile_context>
chip_gen: v7x
topology: tpu7x:2x2x1
jax: 0.10.0
libtpu: 0.0.40
codegen_flags: <defaults>
</compile_context>

<pallas_src>
import jax
import jax.numpy as jnp
from jax.experimental import pallas as pl
from jax.experimental.pallas import tpu as pltpu

_LANE = 128
_SUB = 16          # bf16 sublane packing; batch tiles rounded to this
_NEG_INF = -1e30   # finite large-negative so padded logits never win max / lse


def _round_up(x, m):
    return m * pl.cdiv(x, m)


def mlp_kernel(x_ref, w1_ref, b1_ref, w2_ref, b2_ref, w3_ref, b3_ref, out_ref):
    # ----- fc1 + ReLU (bf16 MXU operands, f32 accumulate, f32 epilogue) -----
    h1 = jnp.dot(x_ref[...], w1_ref[...], preferred_element_type=jnp.float32)
    h1 = jnp.maximum(h1 + b1_ref[...], 0.0)                  # (tb, 256) f32

    # ----- fc2 + ReLU -----
    h2 = jnp.dot(h1.astype(w2_ref.dtype), w2_ref[...],
                 preferred_element_type=jnp.float32)
    h2 = jnp.maximum(h2 + b2_ref[...], 0.0)                   # (tb, 128) f32

    # ----- fc3 (output padded to a lane-dense 128 columns) -----
    logits = jnp.dot(h2.astype(w3_ref.dtype), w3_ref[...],
                     preferred_element_type=jnp.float32)
    logits = logits + b3_ref[...]                              # padded cols ~ -1e30

    # ----- LogSoftmax over features (padded cols contribute exp() == 0) -----
    m = jnp.max(logits, axis=1, keepdims=True)
    shifted = logits - m
    lse = jnp.log(jnp.sum(jnp.exp(shifted), axis=1, keepdims=True))
    out_ref[...] = (shifted - lse).astype(out_ref.dtype)


def mlp_forward(x, w1, b1, w2, b2, w3, b3, *, tile_b=512,
                compute_dtype=jnp.bfloat16):
    B, D_in = x.shape
    H1 = w1.shape[1]
    H2 = w2.shape[1]
    D_out = w3.shape[1]

    # Adaptive batch tile: don't pad a small batch out to the full default tile.
    tile_b = max(_SUB, min(_round_up(tile_b, _SUB), _round_up(B, _SUB)))

    # Padded sizes: K -> multiple of 128, output features -> 128, batch -> tile_b.
    D_in_p = _round_up(D_in, _LANE)
    D_out_p = _round_up(D_out, _LANE)
    B_p = _round_up(B, tile_b)

    # ---- prepare inputs (bf16 matmul operands, f32 biases) ----
    xc = x.astype(compute_dtype)
    if D_in_p != D_in:
        xc = jnp.pad(xc, ((0, 0), (0, D_in_p - D_in)))
    if B_p != B:
        xc = jnp.pad(xc, ((0, B_p - B), (0, 0)))

    w1c = w1.astype(compute_dtype)
    if D_in_p != D_in:
        w1c = jnp.pad(w1c, ((0, D_in_p - D_in), (0, 0)))     # zero rows: no-op in dot
    w2c = w2.astype(compute_dtype)
    w3c = w3.astype(compute_dtype)
    if D_out_p != D_out:
        w3c = jnp.pad(w3c, ((0, 0), (0, D_out_p - D_out)))   # zero columns

    b1r = b1.astype(jnp.float32).reshape(1, H1)
    b2r = b2.astype(jnp.float32).reshape(1, H2)
    b3r = b3.astype(jnp.float32).reshape(1, D_out)
    if D_out_p != D_out:
        b3r = jnp.pad(b3r, ((0, 0), (0, D_out_p - D_out)),
                      constant_values=_NEG_INF)               # mask padded logits

    grid = (B_p // tile_b,)

    out = pl.pallas_call(
        mlp_kernel,
        out_shape=jax.ShapeDtypeStruct((B_p, D_out_p), jnp.float32),
        grid_spec=pltpu.PrefetchScalarGridSpec(
            num_scalar_prefetch=0,
            grid=grid,
            in_specs=[
                pl.BlockSpec((tile_b, D_in_p), lambda i: (i, 0)),  # x tile (streamed)
                # Weights/biases: constant index_map -> fetched once, kept
                # resident in VMEM (Pallas skips the copy when the block index
                # is unchanged between grid steps).
                pl.BlockSpec((D_in_p, H1), lambda i: (0, 0)),      # w1
                pl.BlockSpec((1, H1), lambda i: (0, 0)),           # b1
                pl.BlockSpec((H1, H2), lambda i: (0, 0)),          # w2
                pl.BlockSpec((1, H2), lambda i: (0, 0)),           # b2
                pl.BlockSpec((H2, D_out_p), lambda i: (0, 0)),     # w3 (padded cols)
                pl.BlockSpec((1, D_out_p), lambda i: (0, 0)),      # b3 (padded cols)
            ],
            out_specs=pl.BlockSpec((tile_b, D_out_p), lambda i: (i, 0)),
        ),
        compiler_params=pltpu.CompilerParams(
            dimension_semantics=("parallel",),   # megacore-shard batch tiles on v7x
        ),
    )(xc, w1c, b1r, w2c, b2r, w3c, b3r)

    # Drop batch padding and the padded logit columns.
    return out[:B, :D_out]


def reference_forward(x, w1, b1, w2, b2, w3, b3, compute_dtype=jnp.bfloat16):
    # Same mixed-precision math as the kernel (bf16 operands, f32 accumulation).
    xc = x.astype(compute_dtype)
    h1 = jnp.maximum(
        jnp.dot(xc, w1.astype(compute_dtype),
                preferred_element_type=jnp.float32) + b1, 0.0)
    h2 = jnp.maximum(
        jnp.dot(h1.astype(compute_dtype), w2.astype(compute_dtype),
                preferred_element_type=jnp.float32) + b2, 0.0)
    logits = jnp.dot(h2.astype(compute_dtype), w3.astype(compute_dtype),
                     preferred_element_type=jnp.float32) + b3
    return jax.nn.log_softmax(logits, axis=1)


if __name__ == "__main__":
    key = jax.random.PRNGKey(0)
    k_x, k_w1, k_b1, k_w2, k_b2, k_w3, k_b3 = jax.random.split(key, 7)

    B = 8  # small test batch (adaptive tile -> one 16-row tile, not 256/512)
    D_in, H1, H2, D_out = 784, 256, 128, 10

    x = jax.random.normal(k_x, (B, D_in), dtype=jnp.float32)

    # Deterministic parameter init (weights stored (in, out) == W.T of PyTorch)
    w1 = jax.random.normal(k_w1, (D_in, H1), dtype=jnp.float32) * 0.02
    b1 = jax.random.normal(k_b1, (H1,), dtype=jnp.float32) * 0.02
    w2 = jax.random.normal(k_w2, (H1, H2), dtype=jnp.float32) * 0.02
    b2 = jax.random.normal(k_b2, (H2,), dtype=jnp.float32) * 0.02
    w3 = jax.random.normal(k_w3, (H2, D_out), dtype=jnp.float32) * 0.02
    b3 = jax.random.normal(k_b3, (D_out,), dtype=jnp.float32) * 0.02

    out = mlp_forward(x, w1, b1, w2, b2, w3, b3)
    out = jax.block_until_ready(out)

    ref = reference_forward(x, w1, b1, w2, b2, w3, b3)
    assert out.shape == (B, D_out)
    assert jnp.allclose(out, ref, atol=1e-3, rtol=1e-3), "mismatch vs reference"

    print("KERNEL_OK")
</pallas_src>

<mosaic_0001>
module attributes {stable_mosaic.version = 11 : i64} {
  func.func @mlp_kernel(%arg0: i32, %arg1: memref<16x896xbf16, #tpu.memory_space<vmem>>, %arg2: memref<896x256xbf16, #tpu.memory_space<vmem>>, %arg3: memref<1x256xf32, #tpu.memory_space<vmem>>, %arg4: memref<256x128xbf16, #tpu.memory_space<vmem>>, %arg5: memref<1x128xf32, #tpu.memory_space<vmem>>, %arg6: memref<128x128xbf16, #tpu.memory_space<vmem>>, %arg7: memref<1x128xf32, #tpu.memory_space<vmem>>, %arg8: memref<16x128xf32, #tpu.memory_space<vmem>>) attributes {dimension_semantics = [#tpu.dimension_semantics<parallel>], iteration_bounds = array<i64: 1>, scalar_prefetch = 0 : i64, scratch_operands = 0 : i64, tpu.core_type = #tpu.core_type<tc>, window_params = [{transform_indices = @transform_0, window_bounds = array<i64: 16, 896>}, {pipeline_mode = #tpu.pipeline_mode<synchronous>, transform_indices = @transform_1, window_bounds = array<i64: 896, 256>}, {pipeline_mode = #tpu.pipeline_mode<synchronous>, transform_indices = @transform_2, window_bounds = array<i64: 1, 256>}, {pipeline_mode = #tpu.pipeline_mode<synchronous>, transform_indices = @transform_3, window_bounds = array<i64: 256, 128>}, {pipeline_mode = #tpu.pipeline_mode<synchronous>, transform_indices = @transform_4, window_bounds = array<i64: 1, 128>}, {pipeline_mode = #tpu.pipeline_mode<synchronous>, transform_indices = @transform_5, window_bounds = array<i64: 128, 128>}, {pipeline_mode = #tpu.pipeline_mode<synchronous>, transform_indices = @transform_6, window_bounds = array<i64: 1, 128>}, {transform_indices = @transform_7, window_bounds = array<i64: 16, 128>}]} {
    %c0 = arith.constant 0 : index
    %c0_0 = arith.constant 0 : index
    %0 = vector.load %arg1[%c0, %c0_0] : memref<16x896xbf16, #tpu.memory_space<vmem>>, vector<16x896xbf16>
    %c0_1 = arith.constant 0 : index
    %c0_2 = arith.constant 0 : index
    %1 = vector.load %arg2[%c0_1, %c0_2] : memref<896x256xbf16, #tpu.memory_space<vmem>>, vector<896x256xbf16>
    %cst = arith.constant dense<0.000000e+00> : vector<16x256xf32>
    %2 = tpu.matmul %0, %1, %cst {dimension_numbers = #tpu.dot_dimension_numbers<[1], [0], [0], [1], [0, 0, 1, 1], [], []>} : vector<16x896xbf16>, vector<896x256xbf16>, vector<16x256xf32> -> vector<16x256xf32>
    %c0_3 = arith.constant 0 : index
    %c0_4 = arith.constant 0 : index
    %3 = vector.load %arg3[%c0_3, %c0_4] : memref<1x256xf32, #tpu.memory_space<vmem>>, vector<1x256xf32>
    %4 = vector.broadcast %3 : vector<1x256xf32> to vector<16x256xf32>
    %5 = arith.addf %2, %4 : vector<16x256xf32>
    %cst_5 = arith.constant 0.000000e+00 : f32
    %6 = vector.broadcast %cst_5 : f32 to vector<16x256xf32>
    %7 = arith.maximumf %5, %6 : vector<16x256xf32>
    %8 = arith.truncf %7 : vector<16x256xf32> to vector<16x256xbf16>
    %c0_6 = arith.constant 0 : index
    %c0_7 = arith.constant 0 : index
    %9 = vector.load %arg4[%c0_6, %c0_7] : memref<256x128xbf16, #tpu.memory_space<vmem>>, vector<256x128xbf16>
    %cst_8 = arith.constant dense<0.000000e+00> : vector<16x128xf32>
    %10 = tpu.matmul %8, %9, %cst_8 {dimension_numbers = #tpu.dot_dimension_numbers<[1], [0], [0], [1], [0, 0, 1, 1], [], []>} : vector<16x256xbf16>, vector<256x128xbf16>, vector<16x128xf32> -> vector<16x128xf32>
    %c0_9 = arith.constant 0 : index
    %c0_10 = arith.constant 0 : index
    %11 = vector.load %arg5[%c0_9, %c0_10] : memref<1x128xf32, #tpu.memory_space<vmem>>, vector<1x128xf32>
    %12 = vector.broadcast %11 : vector<1x128xf32> to vector<16x128xf32>
    %13 = arith.addf %10, %12 : vector<16x128xf32>
    %cst_11 = arith.constant 0.000000e+00 : f32
    %14 = vector.broadcast %cst_11 : f32 to vector<16x128xf32>
    %15 = arith.maximumf %13, %14 : vector<16x128xf32>
    %16 = arith.truncf %15 : vector<16x128xf32> to vector<16x128xbf16>
    %c0_12 = arith.constant 0 : index
    %c0_13 = arith.constant 0 : index
    %17 = vector.load %arg6[%c0_12, %c0_13] : memref<128x128xbf16, #tpu.memory_space<vmem>>, vector<128x128xbf16>
    %cst_14 = arith.constant dense<0.000000e+00> : vector<16x128xf32>
    %18 = tpu.matmul %16, %17, %cst_14 {dimension_numbers = #tpu.dot_dimension_numbers<[1], [0], [0], [1], [0, 0, 1, 1], [], []>} : vector<16x128xbf16>, vector<128x128xbf16>, vector<16x128xf32> -> vector<16x128xf32>
    %c0_15 = arith.constant 0 : index
    %c0_16 = arith.constant 0 : index
    %19 = vector.load %arg7[%c0_15, %c0_16] : memref<1x128xf32, #tpu.memory_space<vmem>>, vector<1x128xf32>
    %20 = vector.broadcast %19 : vector<1x128xf32> to vector<16x128xf32>
    %21 = arith.addf %18, %20 : vector<16x128xf32>
    %cst_17 = arith.constant dense<0xFF800000> : vector<16xf32>
    %22 = vector.multi_reduction <maximumf>, %21, %cst_17 [1] : vector<16x128xf32> to vector<16xf32>
    %23 = vector.shape_cast %22 : vector<16xf32> to vector<16x1xf32>
    %24 = vector.broadcast %23 : vector<16x1xf32> to vector<16x128xf32>
    %25 = arith.subf %21, %24 : vector<16x128xf32>
    %26 = math.exp %25 : vector<16x128xf32>
    %cst_18 = arith.constant dense<0.000000e+00> : vector<16xf32>
    %27 = vector.multi_reduction <add>, %26, %cst_18 [1] : vector<16x128xf32> to vector<16xf32>
    %28 = vector.shape_cast %27 : vector<16xf32> to vector<16x1xf32>
    %29 = math.log %28 : vector<16x1xf32>
    %30 = vector.broadcast %29 : vector<16x1xf32> to vector<16x128xf32>
    %31 = arith.subf %25, %30 : vector<16x128xf32>
    %c0_19 = arith.constant 0 : index
    %c0_20 = arith.constant 0 : index
    %32 = vector.load %arg8[%c0_19, %c0_20] : memref<16x128xf32, #tpu.memory_space<vmem>>, vector<16x128xf32>
    tpu.vector_store %arg8[%c0_19, %c0_20], %31 {strides = array<i32>} : memref<16x128xf32, #tpu.memory_space<vmem>>, vector<16x128xf32>,
    return
  }
  func.func @transform_0(%arg0: i32) -> (i32, i32) {
    %c0_i32 = arith.constant 0 : i32
    %c0_i32_0 = arith.constant 0 : i32
    return %arg0, %c0_i32 : i32, i32
  }
  func.func @transform_1(%arg0: i32) -> (i32, i32) {
    %c0_i32 = arith.constant 0 : i32
    %c0_i32_0 = arith.constant 0 : i32
    %c0_i32_1 = arith.constant 0 : i32
    return %c0_i32, %c0_i32_0 : i32, i32
  }
  func.func @transform_2(%arg0: i32) -> (i32, i32) {
    %c0_i32 = arith.constant 0 : i32
    %c0_i32_0 = arith.constant 0 : i32
    %c0_i32_1 = arith.constant 0 : i32
    return %c0_i32, %c0_i32_0 : i32, i32
  }
  func.func @transform_3(%arg0: i32) -> (i32, i32) {
    %c0_i32 = arith.constant 0 : i32
    %c0_i32_0 = arith.constant 0 : i32
    %c0_i32_1 = arith.constant 0 : i32
    return %c0_i32, %c0_i32_0 : i32, i32
  }
  func.func @transform_4(%arg0: i32) -> (i32, i32) {
    %c0_i32 = arith.constant 0 : i32
    %c0_i32_0 = arith.constant 0 : i32
    %c0_i32_1 = arith.constant 0 : i32
    return %c0_i32, %c0_i32_0 : i32, i32
  }
  func.func @transform_5(%arg0: i32) -> (i32, i32) {
    %c0_i32 = arith.constant 0 : i32
    %c0_i32_0 = arith.constant 0 : i32
    %c0_i32_1 = arith.constant 0 : i32
    return %c0_i32, %c0_i32_0 : i32, i32
  }
  func.func @transform_6(%arg0: i32) -> (i32, i32) {
    %c0_i32 = arith.constant 0 : i32
    %c0_i32_0 = arith.constant 0 : i32
    %c0_i32_1 = arith.constant 0 : i32
    return %c0_i32, %c0_i32_0 : i32, i32
  }
  func.func @transform_7(%arg0: i32) -> (i32, i32) {
    %c0_i32 = arith.constant 0 : i32
    %c0_i32_0 = arith.constant 0 : i32
    return %arg0, %c0_i32 : i32, i32
  }
}

</mosaic_0001>

<llo_original>
// kernel: tpu_custom_call.1
$region0: #{tpu_custom_call.1}
  #allocation0 [shape = 'u32[]', space=smem, size = 0x4, offset = 0x4, fixed_abs, tag = 'smem constant byte address 0x4 - core index']
  #allocation1 [shape = 'u32[144,128]{1,0:T(1,128)}', space=vmem, size = 0x12000, scoped, tag = 'internal scratch']
  %s0 = inlined_call_operand.hbm [shape: bf16[16,896], index: 0, kind: input, shape index: {}]
  %s1 = inlined_call_operand.hbm [shape: bf16[896,256], index: 1, kind: input, shape index: {}]
  %s2 = inlined_call_operand.vmem [shape: f32[1,256], index: 2, kind: input, shape index: {}]
  %s3 = inlined_call_operand.hbm [shape: bf16[256,128], index: 3, kind: input, shape index: {}]
  %s4 = inlined_call_operand.vmem [shape: f32[1,128], index: 4, kind: input, shape index: {}]
  %s5 = inlined_call_operand.hbm [shape: bf16[128,128], index: 5, kind: input, shape index: {}]
  %s6 = inlined_call_operand.vmem [shape: f32[1,128], index: 6, kind: input, shape index: {}]
  %s7 = inlined_call_operand.hbm [shape: f32[16,128], index: 7, kind: output, shape index: {}]
  %s8 = sld [smem:[#allocation0]]
  $region54: #{tpu_custom_call.1} parent=0
    _
  %s10 = ssub.s32 1, %s8
  %s11 = scalar_select 0, %s10, %s8
  $region1: #{tpu_custom_call.1} parent=0
    #allocation2 [shape = 'u8[28672]{0}', space=vmem, size = 0x7000, scoped, tag = 'input window, operand 0, single buffered']
    #allocation3 [shape = 's32[1]{0}', space=sflag, size = 0x4, scoped, tag = 'scoped memory for tpu_custom_call.1']
    #allocation4 [shape = 's32[1]{0}', space=sflag, size = 0x4, scoped, tag = 'scoped memory for tpu_custom_call.1']
    #allocation5 [shape = 'u8[458752]{0}', space=vmem, size = 0x70000, scoped, tag = 'input window, operand 1, single buffered']
    #allocation6 [shape = 's32[1]{0}', space=sflag, size = 0x4, scoped, tag = 'scoped memory for tpu_custom_call.1']
    #allocation7 [shape = 'u8[65536]{0}', space=vmem, size = 0x10000, scoped, tag = 'input window, operand 3, single buffered']
    #allocation8 [shape = 'u8[32768]{0}', space=vmem, size = 0x8000, scoped, tag = 'input window, operand 5, single buffered']
    #allocation9 [shape = 's32[1]{0}', space=sflag, size = 0x4, scoped, tag = 'scoped memory for tpu_custom_call.1']
    #allocation10 [shape = 'u8[8192]{0}', space=vmem, size = 0x2000, scoped, tag = 'output window, operand 0, single buffered']
    %12 = vsyncpa [#allocation3], 0
    %13 = vsyncpa [#allocation6], 0
    %14 = vsyncpa [#allocation9], 0
    %15 = vsyncpa [#allocation4], 0
    // Predicated region
    $region2: #{tpu_custom_call.1} parent=1 // pred_check
      _
    $region3: #{tpu_custom_call.1} parent=1 // pred_check_branch
      %17 = sbr.rel (0) target = $region5
    $region4: #{tpu_custom_call.1} parent=1 // pred_region
      %s19 = ssub.s32 896, 896
      %20 = vsyncadd [#allocation3], %s19
      %s21 = sshll.u32 [#allocation2], 4
      %s22 = int_to_ptr.vmem [resolvable:$true] %s21
      %27 = dma.hbm_to_vmem [thread:$0]  %s0, 896, %s22, [#allocation3], 448, 448, 28
    $region5: #{tpu_custom_call.1} parent=1 // pred_fallthru
      _
    // Predicated region
    $region6: #{tpu_custom_call.1} parent=1 // pred_check
      _
    $region7: #{tpu_custom_call.1} parent=1 // pred_check_branch
      %29 = sbr.rel (0) target = $region9
    $region8: #{tpu_custom_call.1} parent=1 // pred_region
      %s31 = ssub.s32 14336, 14336
      %32 = vsyncadd [#allocation6], %s31
      %s33 = sshll.u32 [#allocation5], 4
      %s34 = int_to_ptr.vmem [resolvable:$true] %s33
      %39 = dma.hbm_to_vmem [thread:$0]  %s1, 14336, %s34, [#allocation6], 128, 128, 8
    $region9: #{tpu_custom_call.1} parent=1 // pred_fallthru
      _
    // Predicated region
    $region10: #{tpu_custom_call.1} parent=1 // pred_check
      _
    $region11: #{tpu_custom_call.1} parent=1 // pred_check_branch
      %41 = sbr.rel (0) target = $region13
    $region12: #{tpu_custom_call.1} parent=1 // pred_region
      _
    $region13: #{tpu_custom_call.1} parent=1 // pred_fallthru
      _
    // Predicated region
    $region14: #{tpu_custom_call.1} parent=1 // pred_check
      _
    $region15: #{tpu_custom_call.1} parent=1 // pred_check_branch
      %43 = sbr.rel (0) target = $region17
    $region16: #{tpu_custom_call.1} parent=1 // pred_region
      %s45 = ssub.s32 2048, 2048
      %46 = vsyncadd [#allocation6], %s45
      %s47 = sshll.u32 [#allocation7], 4
      %s48 = int_to_ptr.vmem [resolvable:$true] %s47
      %53 = dma.hbm_to_vmem [thread:$0]  %s3, 2048, %s48, [#allocation6], 64, 64, 4
    $region17: #{tpu_custom_call.1} parent=1 // pred_fallthru
      _
    // Predicated region
    $region18: #{tpu_custom_call.1} parent=1 // pred_check
      _
    $region19: #{tpu_custom_call.1} parent=1 // pred_check_branch
      %55 = sbr.rel (0) target = $region21
    $region20: #{tpu_custom_call.1} parent=1 // pred_region
      _
    $region21: #{tpu_custom_call.1} parent=1 // pred_fallthru
      _
    // Predicated region
    $region22: #{tpu_custom_call.1} parent=1 // pred_check
      _
    $region23: #{tpu_custom_call.1} parent=1 // pred_check_branch
      %57 = sbr.rel (0) target = $region25
    $region24: #{tpu_custom_call.1} parent=1 // pred_region
      %s59 = ssub.s32 1024, 1024
      %60 = vsyncadd [#allocation9], %s59
      %s61 = sshll.u32 [#allocation8], 4
      %s62 = int_to_ptr.vmem [resolvable:$true] %s61
      %67 = dma.hbm_to_vmem [thread:$0]  %s5, 1024, %s62, [#allocation9], 64, 64, 4
    $region25: #{tpu_custom_call.1} parent=1 // pred_fallthru
      _
    // Predicated region
    $region26: #{tpu_custom_call.1} parent=1 // pred_check
      _
    $region27: #{tpu_custom_call.1} parent=1 // pred_check_branch
      %69 = sbr.rel (0) target = $region29
    $region28: #{tpu_custom_call.1} parent=1 // pred_region
      _
    $region29: #{tpu_custom_call.1} parent=1 // pred_fallthru
      _
    // Predicated region
    $region30: #{tpu_custom_call.1} parent=1 // pred_check
      _
    $region31: #{tpu_custom_call.1} parent=1 // pred_check_branch
      %71 = sbr.rel (0) target = $region33
    $region32: #{tpu_custom_call.1} parent=1 // pred_region
      %72 = dma.done [#allocation3], 896
    $region33: #{tpu_custom_call.1} parent=1 // pred_fallthru
      _
    // Predicated region
    $region34: #{tpu_custom_call.1} parent=1 // pred_check
      _
    $region35: #{tpu_custom_call.1} parent=1 // pred_check_branch
      %74 = sbr.rel (0) target = $region37
    $region36: #{tpu_custom_call.1} parent=1 // pred_region
      %75 = dma.done [#allocation6], 14336
    $region37: #{tpu_custom_call.1} parent=1 // pred_fallthru
      _
    // Predicated region
    $region38: #{tpu_custom_call.1} parent=1 // pred_check
      _
    $region39: #{tpu_custom_call.1} parent=1 // pred_check_branch
      %77 = sbr.rel (0) target = $region41
    $region40: #{tpu_custom_call.1} parent=1 // pred_region
      %78 = dma.done [#allocation6], 2048
    $region41: #{tpu_custom_call.1} parent=1 // pred_fallthru
      _
    // Predicated region
    $region42: #{tpu_custom_call.1} parent=1 // pred_check
      _
    $region43: #{tpu_custom_call.1} parent=1 // pred_check_branch
      %80 = sbr.rel (0) target = $region45
    $region44: #{tpu_custom_call.1} parent=1 // pred_region
      %81 = dma.done [#allocation9], 1024
    $region45: #{tpu_custom_call.1} parent=1 // pred_fallthru
      _
    %v83 = vld [vmem:[#allocation2] sm:$0xff]
    %v84 = vld [vmem:[#allocation2 + $0x8] sm:$0xff]
    %v85 = vld [vmem:[#allocation2 + $0x10] sm:$0xff]
    %v86 = vld [vmem:[#allocation2 + $0x18] sm:$0xf]
    %v87 = vld [vmem:[#allocation2 + $0x1c] sm:$0xff]
    %v88 = vld [vmem:[#allocation2 + $0x24] sm:$0xff]
    %v89 = vld [vmem:[#allocation2 + $0x2c] sm:$0xff]
    %v90 = vld [vmem:[#allocation2 + $0x34] sm:$0xf]
    %v91 = vld [vmem:[#allocation5] sm:$0xff]
    %v92 = vld [vmem:[#allocation5 + $0x8] sm:$0xff]
    %v93 = vld [vmem:[#allocation5 + $0x10] sm:$0xff]
    %v94 = vld [vmem:[#allocation5 + $0x18] sm:$0xff]
    %v95 = vld [vmem:[#allocation5 + $0x20] sm:$0xff]
    %v96 = vld [vmem:[#allocation5 + $0x28] sm:$0xff]
    %v97 = vld [vmem:[#allocation5 + $0x30] sm:$0xff]
    %v98 = vld [vmem:[#allocation5 + $0x38] sm:$0xff]
    %v99 = vld [vmem:[#allocation5 + $0x40] sm:$0xff]
    %v100 = vld [vmem:[#allocation5 + $0x48] sm:$0xff]
    %v101 = vld [vmem:[#allocation5 + $0x50] sm:$0xff]
    %v102 = vld [vmem:[#allocation5 + $0x58] sm:$0xff]
    %v103 = vld [vmem:[#allocation5 + $0x60] sm:$0xff]
    %v104 = vld [vmem:[#allocation5 + $0x68] sm:$0xff]
    %v105 = vld [vmem:[#allocation5 + $0x70] sm:$0xff]
    %v106 = vld [vmem:[#allocation5 + $0x78] sm:$0xff]
    %v107 = vld [vmem:[#allocation5 + $0x80] sm:$0xff]
    %v108 = vld [vmem:[#allocation5 + $0x88] sm:$0xff]
    %v109 = vld [vmem:[#allocation5 + $0x90] sm:$0xff]
    %v110 = vld [vmem:[#allocation5 + $0x98] sm:$0xff]
    %v111 = vld [vmem:[#allocation5 + $0xa0] sm:$0xff]
    %v112 = vld [vmem:[#allocation5 + $0xa8] sm:$0xff]
    %v113 = vld [vmem:[#allocation5 + $0xb0] sm:$0xff]
    %v114 = vld [vmem:[#allocation5 + $0xb8] sm:$0xff]
    %v115 = vld [vmem:[#allocation5 + $0xc0] sm:$0xff]
    %v116 = vld [vmem:[#allocation5 + $0xc8] sm:$0xff]
    %v117 = vld [vmem:[#allocation5 + $0xd0] sm:$0xff]
    %v118 = vld [vmem:[#allocation5 + $0xd8] sm:$0xff]
    %v119 = vld [vmem:[#allocation5 + $0xe0] sm:$0xff]
    %v120 = vld [vmem:[#allocation5 + $0xe8] sm:$0xff]
    %v121 = vld [vmem:[#allocation5 + $0xf0] sm:$0xff]
    %v122 = vld [vmem:[#allocation5 + $0xf8] sm:$0xff]
    %v123 = vld [vmem:[#allocation5 + $0x100] sm:$0xff]
    %v124 = vld [vmem:[#allocation5 + $0x108] sm:$0xff]
    %v125 = vld [vmem:[#allocation5 + $0x110] sm:$0xff]
    %v126 = vld [vmem:[#allocation5 + $0x118] sm:$0xff]
    %v127 = vld [vmem:[#allocation5 + $0x120] sm:$0xff]
    %v128 = vld [vmem:[#allocation5 + $0x128] sm:$0xff]
    %v129 = vld [vmem:[#allocation5 + $0x130] sm:$0xff]
    %v130 = vld [vmem:[#allocation5 + $0x138] sm:$0xff]
    %v131 = vld [vmem:[#allocation5 + $0x140] sm:$0xff]
    %v132 = vld [vmem:[#allocation5 + $0x148] sm:$0xff]
    %v133 = vld [vmem:[#allocation5 + $0x150] sm:$0xff]
    %v134 = vld [vmem:[#allocation5 + $0x158] sm:$0xff]
    %v135 = vld [vmem:[#allocation5 + $0x160] sm:$0xff]
    %v136 = vld [vmem:[#allocation5 + $0x168] sm:$0xff]
    %v137 = vld [vmem:[#allocation5 + $0x170] sm:$0xff]
    %v138 = vld [vmem:[#allocation5 + $0x178] sm:$0xff]
    %v139 = vld [vmem:[#allocation5 + $0x180] sm:$0xff]
    %v140 = vld [vmem:[#allocation5 + $0x188] sm:$0xff]
    %v141 = vld [vmem:[#allocation5 + $0x190] sm:$0xff]
    %v142 = vld [vmem:[#allocation5 + $0x198] sm:$0xff]
    %v143 = vld [vmem:[#allocation5 + $0x1a0] sm:$0xff]
    %v144 = vld [vmem:[#allocation5 + $0x1a8] sm:$0xff]
    %v145 = vld [vmem:[#allocation5 + $0x1b0] sm:$0xff]
    %v146 = vld [vmem:[#allocation5 + $0x1b8] sm:$0xff]
    %v147 = vld [vmem:[#allocation5 + $0x1c0] sm:$0xff]
    %v148 = vld [vmem:[#allocation5 + $0x1c8] sm:$0xff]
    %v149 = vld [vmem:[#allocation5 + $0x1d0] sm:$0xff]
    %v150 = vld [vmem:[#allocation5 + $0x1d8] sm:$0xff]
    %v151 = vld [vmem:[#allocation5 + $0x1e0] sm:$0xff]
    %v152 = vld [vmem:[#allocation5 + $0x1e8] sm:$0xff]
    %v153 = vld [vmem:[#allocation5 + $0x1f0] sm:$0xff]
    %v154 = vld [vmem:[#allocation5 + $0x1f8] sm:$0xff]
    %v155 = vld [vmem:[#allocation5 + $0x200] sm:$0xff]
    %v156 = vld [vmem:[#allocation5 + $0x208] sm:$0xff]
    %v157 = vld [vmem:[#allocation5 + $0x210] sm:$0xff]
    %v158 = vld [vmem:[#allocation5 + $0x218] sm:$0xff]
    %v159 = vld [vmem:[#allocation5 + $0x220] sm:$0xff]
    %v160 = vld [vmem:[#allocation5 + $0x228] sm:$0xff]
    %v161 = vld [vmem:[#allocation5 + $0x230] sm:$0xff]
    %v162 = vld [vmem:[#allocation5 + $0x238] sm:$0xff]
    %v163 = vld [vmem:[#allocation5 + $0x240] sm:$0xff]
    %v164 = vld [vmem:[#allocation5 + $0x248] sm:$0xff]
    %v165 = vld [vmem:[#allocation5 + $0x250] sm:$0xff]
    %v166 = vld [vmem:[#allocation5 + $0x258] sm:$0xff]
    %v167 = vld [vmem:[#allocation5 + $0x260] sm:$0xff]
    %v168 = vld [vmem:[#allocation5 + $0x268] sm:$0xff]
    %v169 = vld [vmem:[#allocation5 + $0x270] sm:$0xff]
    %v170 = vld [vmem:[#allocation5 + $0x278] sm:$0xff]
    %v171 = vld [vmem:[#allocation5 + $0x280] sm:$0xff]
    %v172 = vld [vmem:[#allocation5 + $0x288] sm:$0xff]
    %v173 = vld [vmem:[#allocation5 + $0x290] sm:$0xff]
    %v174 = vld [vmem:[#allocation5 + $0x298] sm:$0xff]
    %v175 = vld [vmem:[#allocation5 + $0x2a0] sm:$0xff]
    %v176 = vld [vmem:[#allocation5 + $0x2a8] sm:$0xff]
    %v177 = vld [vmem:[#allocation5 + $0x2b0] sm:$0xff]
    %v178 = vld [vmem:[#allocation5 + $0x2b8] sm:$0xff]
    %v179 = vld [vmem:[#allocation5 + $0x2c0] sm:$0xff]
    %v180 = vld [vmem:[#allocation5 + $0x2c8] sm:$0xff]
    %v181 = vld [vmem:[#allocation5 + $0x2d0] sm:$0xff]
    %v182 = vld [vmem:[#allocation5 + $0x2d8] sm:$0xff]
    %v183 = vld [vmem:[#allocation5 + $0x2e0] sm:$0xff]
    %v184 = vld [vmem:[#allocation5 + $0x2e8] sm:$0xff]
    %v185 = vld [vmem:[#allocation5 + $0x2f0] sm:$0xff]
    %v186 = vld [vmem:[#allocation5 + $0x2f8] sm:$0xff]
    %v187 = vld [vmem:[#allocation5 + $0x300] sm:$0xff]
    %v188 = vld [vmem:[#allocation5 + $0x308] sm:$0xff]
    %v189 = vld [vmem:[#allocation5 + $0x310] sm:$0xff]
    %v190 = vld [vmem:[#allocation5 + $0x318] sm:$0xff]
    %v191 = vld [vmem:[#allocation5 + $0x320] sm:$0xff]
    %v192 = vld [vmem:[#allocation5 + $0x328] sm:$0xff]
    %v193 = vld [vmem:[#allocation5 + $0x330] sm:$0xff]
    %v194 = vld [vmem:[#allocation5 + $0x338] sm:$0xff]
    %v195 = vld [vmem:[#allocation5 + $0x340] sm:$0xff]
    %v196 = vld [vmem:[#allocation5 + $0x348] sm:$0xff]
    %v197 = vld [vmem:[#allocation5 + $0x350] sm:$0xff]
    %v198 = vld [vmem:[#allocation5 + $0x358] sm:$0xff]
    %v199 = vld [vmem:[#allocation5 + $0x360] sm:$0xff]
    %v200 = vld [vmem:[#allocation5 + $0x368] sm:$0xff]
    %v201 = vld [vmem:[#allocation5 + $0x370] sm:$0xff]
    %v202 = vld [vmem:[#allocation5 + $0x378] sm:$0xff]
    %v203 = vld [vmem:[%s2] sm:$0x3]
    %v205 = vlaneseq
    %v206 = vshrl.u32 %v205, 7
    %v207 = vsub.s32 0, %v206
    %v208 = vrot.slane %v203, %v207
    %v209 = vlaneseq
    %v210 = vshrl.u32 %v209, 7
    %v211 = vsub.s32 1, %v210
    %v212 = vrot.slane %v203, %v211
    %v223 = vunpack.c.l.b16 %v83
    %v224 = vunpack.c.h.b16 %v83
    %v225 = vunpack.c.l.b16 %v84
    %v226 = vunpack.c.h.b16 %v84
    %v227 = vunpack.c.l.b16 %v85
    %v228 = vunpack.c.h.b16 %v85
    %v229 = vunpack.c.l.b16 %v86
    %v230 = vunpack.c.l.b16 %v87
    %v231 = vunpack.c.h.b16 %v87
    %v232 = vunpack.c.l.b16 %v88
    %v233 = vunpack.c.h.b16 %v88
    %v234 = vunpack.c.l.b16 %v89
    %v235 = vunpack.c.h.b16 %v89
    %v236 = vunpack.c.l.b16 %v90
    %v237 = vpack.c.b16 %v230, %v223
    %v238 = vpack.c.b16 %v231, %v224
    %v239 = vpack.c.b16 %v232, %v225
    %v240 = vpack.c.b16 %v233, %v226
    %v241 = vpack.c.b16 %v234, %v227
    %v242 = vpack.c.b16 %v235, %v228
    %v243 = vpack.c.b16 %v236, %v229
    %v363 = vunpack.c.l.b16 %v91
    %v364 = vunpack.c.h.b16 %v91
    %v365 = vunpack.c.l.b16 %v92
    %v366 = vunpack.c.h.b16 %v92
    %v367 = vunpack.c.l.b16 %v93
    %v368 = vunpack.c.h.b16 %v93
    %v369 = vunpack.c.l.b16 %v94
    %v370 = vunpack.c.h.b16 %v94
    %v371 = vunpack.c.l.b16 %v95
    %v372 = vunpack.c.h.b16 %v95
    %v373 = vunpack.c.l.b16 %v96
    %v374 = vunpack.c.h.b16 %v96
    %v375 = vunpack.c.l.b16 %v97
    %v376 = vunpack.c.h.b16 %v97
    %v377 = vunpack.c.l.b16 %v98
    %v378 = vunpack.c.h.b16 %v98
    %v379 = vunpack.c.l.b16 %v99
    %v380 = vunpack.c.h.b16 %v99
    %v381 = vunpack.c.l.b16 %v100
    %v382 = vunpack.c.h.b16 %v100
    %v383 = vunpack.c.l.b16 %v101
    %v384 = vunpack.c.h.b16 %v101
    %v385 = vunpack.c.l.b16 %v102
    %v386 = vunpack.c.h.b16 %v102
    %v387 = vunpack.c.l.b16 %v103
    %v388 = vunpack.c.h.b16 %v103
    %v389 = vunpack.c.l.b16 %v104
    %v390 = vunpack.c.h.b16 %v104
    %v391 = vunpack.c.l.b16 %v105
    %v392 = vunpack.c.h.b16 %v105
    %v393 = vunpack.c.l.b16 %v106
    %v394 = vunpack.c.h.b16 %v106
    %v395 = vunpack.c.l.b16 %v107
    %v396 = vunpack.c.h.b16 %v107
    %v397 = vunpack.c.l.b16 %v108
    %v398 = vunpack.c.h.b16 %v108
    %v399 = vunpack.c.l.b16 %v109
    %v400 = vunpack.c.h.b16 %v109
    %v401 = vunpack.c.l.b16 %v110
    %v402 = vunpack.c.h.b16 %v110
    %v403 = vunpack.c.l.b16 %v111
    %v404 = vunpack.c.h.b16 %v111
    %v405 = vunpack.c.l.b16 %v112
    %v406 = vunpack.c.h.b16 %v112
    %v407 = vunpack.c.l.b16 %v113
    %v408 = vunpack.c.h.b16 %v113
    %v409 = vunpack.c.l.b16 %v114
    %v410 = vunpack.c.h.b16 %v114
    %v411 = vunpack.c.l.b16 %v115
    %v412 = vunpack.c.h.b16 %v115
    %v413 = vunpack.c.l.b16 %v116
    %v414 = vunpack.c.h.b16 %v116
    %v415 = vunpack.c.l.b16 %v117
    %v416 = vunpack.c.h.b16 %v117
    %v417 = vunpack.c.l.b16 %v118
    %v418 = vunpack.c.h.b16 %v118
    %v419 = vunpack.c.l.b16 %v119
    %v420 = vunpack.c.h.b16 %v119
    %v421 = vunpack.c.l.b16 %v120
    %v422 = vunpack.c.h.b16 %v120
    %v423 = vunpack.c.l.b16 %v121
    %v424 = vunpack.c.h.b16 %v121
    %v425 = vunpack.c.l.b16 %v122
    %v426 = vunpack.c.h.b16 %v122
    %v427 = vunpack.c.l.b16 %v123
    %v428 = vunpack.c.h.b16 %v123
    %v429 = vunpack.c.l.b16 %v124
    %v430 = vunpack.c.h.b16 %v124
    %v431 = vunpack.c.l.b16 %v125
    %v432 = vunpack.c.h.b16 %v125
    %v433 = vunpack.c.l.b16 %v126
    %v434 = vunpack.c.h.b16 %v126
    %v435 = vunpack.c.l.b16 %v127
    %v436 = vunpack.c.h.b16 %v127
    %v437 = vunpack.c.l.b16 %v128
    %v438 = vunpack.c.h.b16 %v128
    %v439 = vunpack.c.l.b16 %v129
    %v440 = vunpack.c.h.b16 %v129
    %v441 = vunpack.c.l.b16 %v130
    %v442 = vunpack.c.h.b16 %v130
    %v443 = vunpack.c.l.b16 %v131
    %v444 = vunpack.c.h.b16 %v131
    %v445 = vunpack.c.l.b16 %v132
    %v446 = vunpack.c.h.b16 %v132
    %v447 = vunpack.c.l.b16 %v133
    %v448 = vunpack.c.h.b16 %v133
    %v449 = vunpack.c.l.b16 %v134
    %v450 = vunpack.c.h.b16 %v134
    %v451 = vunpack.c.l.b16 %v135
    %v452 = vunpack.c.h.b16 %v135
    %v453 = vunpack.c.l.b16 %v136
    %v454 = vunpack.c.h.b16 %v136
    %v455 = vunpack.c.l.b16 %v137
    %v456 = vunpack.c.h.b16 %v137
    %v457 = vunpack.c.l.b16 %v138
    %v458 = vunpack.c.h.b16 %v138
    %v459 = vunpack.c.l.b16 %v139
    %v460 = vunpack.c.h.b16 %v139
    %v461 = vunpack.c.l.b16 %v140
    %v462 = vunpack.c.h.b16 %v140
    %v463 = vunpack.c.l.b16 %v141
    %v464 = vunpack.c.h.b16 %v141
    %v465 = vunpack.c.l.b16 %v142
    %v466 = vunpack.c.h.b16 %v142
    %v467 = vunpack.c.l.b16 %v143
    %v468 = vunpack.c.h.b16 %v143
    %v469 = vunpack.c.l.b16 %v144
    %v470 = vunpack.c.h.b16 %v144
    %v471 = vunpack.c.l.b16 %v145
    %v472 = vunpack.c.h.b16 %v145
    %v473 = vunpack.c.l.b16 %v146
    %v474 = vunpack.c.h.b16 %v146
    %v475 = vunpack.c.l.b16 %v147
    %v476 = vunpack.c.h.b16 %v147
    %v477 = vunpack.c.l.b16 %v148
    %v478 = vunpack.c.h.b16 %v148
    %v479 = vunpack.c.l.b16 %v149
    %v480 = vunpack.c.h.b16 %v149
    %v481 = vunpack.c.l.b16 %v150
    %v482 = vunpack.c.h.b16 %v150
    %v483 = vunpack.c.l.b16 %v151
    %v484 = vunpack.c.h.b16 %v151
    %v485 = vunpack.c.l.b16 %v152
    %v486 = vunpack.c.h.b16 %v152
    %v487 = vunpack.c.l.b16 %v153
    %v488 = vunpack.c.h.b16 %v153
    %v489 = vunpack.c.l.b16 %v154
    %v490 = vunpack.c.h.b16 %v154
    %v491 = vunpack.c.l.b16 %v155
    %v492 = vunpack.c.h.b16 %v155
    %v493 = vunpack.c.l.b16 %v156
    %v494 = vunpack.c.h.b16 %v156
    %v495 = vunpack.c.l.b16 %v157
    %v496 = vunpack.c.h.b16 %v157
    %v497 = vunpack.c.l.b16 %v158
    %v498 = vunpack.c.h.b16 %v158
    %v499 = vunpack.c.l.b16 %v159
    %v500 = vunpack.c.h.b16 %v159
    %v501 = vunpack.c.l.b16 %v160
    %v502 = vunpack.c.h.b16 %v160
    %v503 = vunpack.c.l.b16 %v161
    %v504 = vunpack.c.h.b16 %v161
    %v505 = vunpack.c.l.b16 %v162
    %v506 = vunpack.c.h.b16 %v162
    %v507 = vunpack.c.l.b16 %v163
    %v508 = vunpack.c.h.b16 %v163
    %v509 = vunpack.c.l.b16 %v164
    %v510 = vunpack.c.h.b16 %v164
    %v511 = vunpack.c.l.b16 %v165
    %v512 = vunpack.c.h.b16 %v165
    %v513 = vunpack.c.l.b16 %v166
    %v514 = vunpack.c.h.b16 %v166
    %v515 = vunpack.c.l.b16 %v167
    %v516 = vunpack.c.h.b16 %v167
    %v517 = vunpack.c.l.b16 %v168
    %v518 = vunpack.c.h.b16 %v168
    %v519 = vunpack.c.l.b16 %v169
    %v520 = vunpack.c.h.b16 %v169
    %v521 = vunpack.c.l.b16 %v170
    %v522 = vunpack.c.h.b16 %v170
    %v523 = vunpack.c.l.b16 %v171
    %v524 = vunpack.c.h.b16 %v171
    %v525 = vunpack.c.l.b16 %v172
    %v526 = vunpack.c.h.b16 %v172
    %v527 = vunpack.c.l.b16 %v173
    %v528 = vunpack.c.h.b16 %v173
    %v529 = vunpack.c.l.b16 %v174
    %v530 = vunpack.c.h.b16 %v174
    %v531 = vunpack.c.l.b16 %v175
    %v532 = vunpack.c.h.b16 %v175
    %v533 = vunpack.c.l.b16 %v176
    %v534 = vunpack.c.h.b16 %v176
    %v535 = vunpack.c.l.b16 %v177
    %v536 = vunpack.c.h.b16 %v177
    %v537 = vunpack.c.l.b16 %v178
    %v538 = vunpack.c.h.b16 %v178
    %v539 = vunpack.c.l.b16 %v179
    %v540 = vunpack.c.h.b16 %v179
    %v541 = vunpack.c.l.b16 %v180
    %v542 = vunpack.c.h.b16 %v180
    %v543 = vunpack.c.l.b16 %v181
    %v544 = vunpack.c.h.b16 %v181
    %v545 = vunpack.c.l.b16 %v182
    %v546 = vunpack.c.h.b16 %v182
    %v547 = vunpack.c.l.b16 %v183
    %v548 = vunpack.c.h.b16 %v183
    %v549 = vunpack.c.l.b16 %v184
    %v550 = vunpack.c.h.b16 %v184
    %v551 = vunpack.c.l.b16 %v185
    %v552 = vunpack.c.h.b16 %v185
    %v553 = vunpack.c.l.b16 %v186
    %v554 = vunpack.c.h.b16 %v186
    %v555 = vunpack.c.l.b16 %v187
    %v556 = vunpack.c.h.b16 %v187
    %v557 = vunpack.c.l.b16 %v188
    %v558 = vunpack.c.h.b16 %v188
    %v559 = vunpack.c.l.b16 %v189
    %v560 = vunpack.c.h.b16 %v189
    %v561 = vunpack.c.l.b16 %v190
    %v562 = vunpack.c.h.b16 %v190
    %v563 = vunpack.c.l.b16 %v191
    %v564 = vunpack.c.h.b16 %v191
    %v565 = vunpack.c.l.b16 %v192
    %v566 = vunpack.c.h.b16 %v192
    %v567 = vunpack.c.l.b16 %v193
    %v568 = vunpack.c.h.b16 %v193
    %v569 = vunpack.c.l.b16 %v194
    %v570 = vunpack.c.h.b16 %v194
    %v571 = vunpack.c.l.b16 %v195
    %v572 = vunpack.c.h.b16 %v195
    %v573 = vunpack.c.l.b16 %v196
    %v574 = vunpack.c.h.b16 %v196
    %v575 = vunpack.c.l.b16 %v197
    %v576 = vunpack.c.h.b16 %v197
    %v577 = vunpack.c.l.b16 %v198
    %v578 = vunpack.c.h.b16 %v198
    %v579 = vunpack.c.l.b16 %v199
    %v580 = vunpack.c.h.b16 %v199
    %v581 = vunpack.c.l.b16 %v200
    %v582 = vunpack.c.h.b16 %v200
    %v583 = vunpack.c.l.b16 %v201
    %v584 = vunpack.c.h.b16 %v201
    %v585 = vunpack.c.l.b16 %v202
    %v586 = vunpack.c.h.b16 %v202
    %v587 = vpack.c.b16 %v365, %v363
    %v588 = vpack.c.b16 %v366, %v364
    %v589 = vpack.c.b16 %v369, %v367
    %v590 = vpack.c.b16 %v370, %v368
    %v591 = vpack.c.b16 %v373, %v371
    %v592 = vpack.c.b16 %v374, %v372
    %v593 = vpack.c.b16 %v377, %v375
    %v594 = vpack.c.b16 %v378, %v376
    %v595 = vpack.c.b16 %v381, %v379
    %v596 = vpack.c.b16 %v382, %v380
    %v597 = vpack.c.b16 %v385, %v383
    %v598 = vpack.c.b16 %v386, %v384
    %v599 = vpack.c.b16 %v389, %v387
    %v600 = vpack.c.b16 %v390, %v388
    %v601 = vpack.c.b16 %v393, %v391
    %v602 = vpack.c.b16 %v394, %v392
    %v603 = vpack.c.b16 %v397, %v395
    %v604 = vpack.c.b16 %v398, %v396
    %v605 = vpack.c.b16 %v401, %v399
    %v606 = vpack.c.b16 %v402, %v400
    %v607 = vpack.c.b16 %v405, %v403
    %v608 = vpack.c.b16 %v406, %v404
    %v609 = vpack.c.b16 %v409, %v407
    %v610 = vpack.c.b16 %v410, %v408
    %v611 = vpack.c.b16 %v413, %v411
    %v612 = vpack.c.b16 %v414, %v412
    %v613 = vpack.c.b16 %v417, %v415
    %v614 = vpack.c.b16 %v418, %v416
    %v615 = vpack.c.b16 %v421, %v419
    %v616 = vpack.c.b16 %v422, %v420
    %v617 = vpack.c.b16 %v425, %v423
    %v618 = vpack.c.b16 %v426, %v424
    %v619 = vpack.c.b16 %v429, %v427
    %v620 = vpack.c.b16 %v430, %v428
    %v621 = vpack.c.b16 %v433, %v431
    %v622 = vpack.c.b16 %v434, %v432
    %v623 = vpack.c.b16 %v437, %v435
    %v624 = vpack.c.b16 %v438, %v436
    %v625 = vpack.c.b16 %v441, %v439
    %v626 = vpack.c.b16 %v442, %v440
    %v627 = vpack.c.b16 %v445, %v443
    %v628 = vpack.c.b16 %v446, %v444
    %v629 = vpack.c.b16 %v449, %v447
    %v630 = vpack.c.b16 %v450, %v448
    %v631 = vpack.c.b16 %v453, %v451
    %v632 = vpack.c.b16 %v454, %v452
    %v633 = vpack.c.b16 %v457, %v455
    %v634 = vpack.c.b16 %v458, %v456
    %v635 = vpack.c.b16 %v461, %v459
    %v636 = vpack.c.b16 %v462, %v460
    %v637 = vpack.c.b16 %v465, %v463
    %v638 = vpack.c.b16 %v466, %v464
    %v639 = vpack.c.b16 %v469, %v467
    %v640 = vpack.c.b16 %v470, %v468
    %v641 = vpack.c.b16 %v473, %v471
    %v642 = vpack.c.b16 %v474, %v472
    %v643 = vpack.c.b16 %v477, %v475
    %v644 = vpack.c.b16 %v478, %v476
    %v645 = vpack.c.b16 %v481, %v479
    %v646 = vpack.c.b16 %v482, %v480
    %v647 = vpack.c.b16 %v485, %v483
    %v648 = vpack.c.b16 %v486, %v484
    %v649 = vpack.c.b16 %v489, %v487
    %v650 = vpack.c.b16 %v490, %v488
    %v651 = vpack.c.b16 %v493, %v491
    %v652 = vpack.c.b16 %v494, %v492
    %v653 = vpack.c.b16 %v497, %v495
    %v654 = vpack.c.b16 %v498, %v496
    %v655 = vpack.c.b16 %v501, %v499
    %v656 = vpack.c.b16 %v502, %v500
    %v657 = vpack.c.b16 %v505, %v503
    %v658 = vpack.c.b16 %v506, %v504
    %v659 = vpack.c.b16 %v509, %v507
    %v660 = vpack.c.b16 %v510, %v508
    %v661 = vpack.c.b16 %v513, %v511
    %v662 = vpack.c.b16 %v514, %v512
    %v663 = vpack.c.b16 %v517, %v515
    %v664 = vpack.c.b16 %v518, %v516
    %v665 = vpack.c.b16 %v521, %v519
    %v666 = vpack.c.b16 %v522, %v520
    %v667 = vpack.c.b16 %v525, %v523
    %v668 = vpack.c.b16 %v526, %v524
    %v669 = vpack.c.b16 %v529, %v527
    %v670 = vpack.c.b16 %v530, %v528
    %v671 = vpack.c.b16 %v533, %v531
    %v672 = vpack.c.b16 %v534, %v532
    %v673 = vpack.c.b16 %v537, %v535
    %v674 = vpack.c.b16 %v538, %v536
    %v675 = vpack.c.b16 %v541, %v539
    %v676 = vpack.c.b16 %v542, %v540
    %v677 = vpack.c.b16 %v545, %v543
    %v678 = vpack.c.b16 %v546, %v544
    %v679 = vpack.c.b16 %v549, %v547
    %v680 = vpack.c.b16 %v550, %v548
    %v681 = vpack.c.b16 %v553, %v551
    %v682 = vpack.c.b16 %v554, %v552
    %v683 = vpack.c.b16 %v557, %v555
    %v684 = vpack.c.b16 %v558, %v556
    %v685 = vpack.c.b16 %v561, %v559
    %v686 = vpack.c.b16 %v562, %v560
    %v687 = vpack.c.b16 %v565, %v563
    %v688 = vpack.c.b16 %v566, %v564
    %v689 = vpack.c.b16 %v569, %v567
    %v690 = vpack.c.b16 %v570, %v568
    %v691 = vpack.c.b16 %v573, %v571
    %v692 = vpack.c.b16 %v574, %v572
    %v693 = vpack.c.b16 %v577, %v575
    %v694 = vpack.c.b16 %v578, %v576
    %v695 = vpack.c.b16 %v581, %v579
    %v696 = vpack.c.b16 %v582, %v580
    %v697 = vpack.c.b16 %v585, %v583
    %v698 = vpack.c.b16 %v586, %v584
    %811 = vmatprep.subr.bf16.mxu0 %v588
    %812 = vmatpush1.bf16.msra.mxu0 %v587
    %813 = vmatprep.subr.bf16.mxu0 %v590
    %814 = vmatpush1.bf16.msra.mxu0 %v589
    %815 = vmatprep.subr.bf16.mxu0 %v592
    %816 = vmatpush1.bf16.msra.mxu0 %v591
    %817 = vmatprep.subr.bf16.mxu0 %v594
    %818 = vmatpush1.bf16.msra.mxu0 %v593
    %819 = vmatprep.subr.bf16.mxu0 %v596
    %820 = vmatpush1.bf16.msra.mxu0 %v595
    %821 = vmatprep.subr.bf16.mxu0 %v598
    %822 = vmatpush1.bf16.msra.mxu0 %v597
    %823 = vmatprep.subr.bf16.mxu0 %v600
    %824 = vmatpush1.bf16.msra.mxu0 %v599
    %825 = vmatprep.subr.bf16.mxu0 %v602
    %826 = vmatpush1.bf16.msra.mxu0 %v601
    %827 = vmatprep.subr.bf16.mxu0 %v604
    %828 = vmatpush1.bf16.msra.mxu0 %v603
    %829 = vmatprep.subr.bf16.mxu0 %v606
    %830 = vmatpush1.bf16.msra.mxu0 %v605
    %831 = vmatprep.subr.bf16.mxu0 %v608
    %832 = vmatpush1.bf16.msra.mxu0 %v607
    %833 = vmatprep.subr.bf16.mxu0 %v610
    %834 = vmatpush1.bf16.msra.mxu0 %v609
    %835 = vmatprep.subr.bf16.mxu0 %v612
    %836 = vmatpush1.bf16.msra.mxu0 %v611
    %837 = vmatprep.subr.bf16.mxu0 %v614
    %838 = vmatpush1.bf16.msra.mxu0 %v613
    %839 = vmatprep.subr.bf16.mxu0 %v616
    %840 = vmatpush1.bf16.msra.mxu0 %v615
    %841 = vmatprep.subr.bf16.mxu0 %v618
    %842 = vmatpush1.bf16.msra.mxu0 %v617
    %843 = vmatprep.mubr.bf16.mxu0 %v238
    %844 = vmatmul.mubr.bf16.gmra.mrb[0].mxu0 %v237
    %v845 = vpop.f32.mrb[0].mxu0
    %v846 = vadd.f32 %v208, %v845
    %v847 = vpop.f32.mrb[0].mxu0
    %v848 = vadd.f32 %v212, %v847
    %v849 = vpop.f32.mrb[0].mxu0
    %v850 = vadd.f32 %v208, %v849
    %v851 = vpop.f32.mrb[0].mxu0
    %v852 = vadd.f32 %v212, %v851
    %853 = vdwg.mxu0
    %854 = vmatprep.subr.bf16.mxu0 %v620
    %855 = vmatpush1.bf16.msra.mxu0 %v619
    %856 = vmatprep.subr.bf16.mxu0 %v622
    %857 = vmatpush1.bf16.msra.mxu0 %v621
    %858 = vmatprep.subr.bf16.mxu0 %v624
    %859 = vmatpush1.bf16.msra.mxu0 %v623
    %860 = vmatprep.subr.bf16.mxu0 %v626
    %861 = vmatpush1.bf16.msra.mxu0 %v625
    %862 = vmatprep.subr.bf16.mxu0 %v628
    %863 = vmatpush1.bf16.msra.mxu0 %v627
    %864 = vmatprep.subr.bf16.mxu0 %v630
    %865 = vmatpush1.bf16.msra.mxu0 %v629
    %866 = vmatprep.subr.bf16.mxu0 %v632
    %867 = vmatpush1.bf16.msra.mxu0 %v631
    %868 = vmatprep.subr.bf16.mxu0 %v634
    %869 = vmatpush1.bf16.msra.mxu0 %v633
    %870 = vmatprep.subr.bf16.mxu0 %v636
    %871 = vmatpush1.bf16.msra.mxu0 %v635
    %872 = vmatprep.subr.bf16.mxu0 %v638
    %873 = vmatpush1.bf16.msra.mxu0 %v637
    %874 = vmatprep.subr.bf16.mxu0 %v640
    %875 = vmatpush1.bf16.msra.mxu0 %v639
    %876 = vmatprep.subr.bf16.mxu0 %v642
    %877 = vmatpush1.bf16.msra.mxu0 %v641
    %878 = vmatprep.subr.bf16.mxu0 %v644
    %879 = vmatpush1.bf16.msra.mxu0 %v643
    %880 = vmatprep.subr.bf16.mxu0 %v646
    %881 = vmatpush1.bf16.msra.mxu0 %v645
    %882 = vmatprep.subr.bf16.mxu0 %v648
    %883 = vmatpush1.bf16.msra.mxu0 %v647
    %884 = vmatprep.subr.bf16.mxu0 %v650
    %885 = vmatpush1.bf16.msra.mxu0 %v649
    %886 = vmatprep.mubr.bf16.mxu0 %v240
    %887 = vmatmul.mubr.bf16.gmra.mrb[0].mxu0 %v239
    %v888 = vpop.f32.mrb[0].mxu0
    %v889 = vadd.f32 %v846, %v888
    %v890 = vpop.f32.mrb[0].mxu0
    %v891 = vadd.f32 %v848, %v890
    %v892 = vpop.f32.mrb[0].mxu0
    %v893 = vadd.f32 %v850, %v892
    %v894 = vpop.f32.mrb[0].mxu0
    %v895 = vadd.f32 %v852, %v894
    %896 = vdwg.mxu0
    %897 = vmatprep.subr.bf16.mxu0 %v652
    %898 = vmatpush1.bf16.msra.mxu0 %v651
    %899 = vmatprep.subr.bf16.mxu0 %v654
    %900 = vmatpush1.bf16.msra.mxu0 %v653
    %901 = vmatprep.subr.bf16.mxu0 %v656
    %902 = vmatpush1.bf16.msra.mxu0 %v655
    %903 = vmatprep.subr.bf16.mxu0 %v658
    %904 = vmatpush1.bf16.msra.mxu0 %v657
    %905 = vmatprep.subr.bf16.mxu0 %v660
    %906 = vmatpush1.bf16.msra.mxu0 %v659
    %907 = vmatprep.subr.bf16.mxu0 %v662
    %908 = vmatpush1.bf16.msra.mxu0 %v661
    %909 = vmatprep.subr.bf16.mxu0 %v664
    %910 = vmatpush1.bf16.msra.mxu0 %v663
    %911 = vmatprep.subr.bf16.mxu0 %v666
    %912 = vmatpush1.bf16.msra.mxu0 %v665
    %913 = vmatprep.subr.bf16.mxu0 %v668
    %914 = vmatpush1.bf16.msra.mxu0 %v667
    %915 = vmatprep.subr.bf16.mxu0 %v670
    %916 = vmatpush1.bf16.msra.mxu0 %v669
    %917 = vmatprep.subr.bf16.mxu0 %v672
    %918 = vmatpush1.bf16.msra.mxu0 %v671
    %919 = vmatprep.subr.bf16.mxu0 %v674
    %920 = vmatpush1.bf16.msra.mxu0 %v673
    %921 = vmatprep.subr.bf16.mxu0 %v676
    %922 = vmatpush1.bf16.msra.mxu0 %v675
    %923 = vmatprep.subr.bf16.mxu0 %v678
    %924 = vmatpush1.bf16.msra.mxu0 %v677
    %925 = vmatprep.subr.bf16.mxu0 %v680
    %926 = vmatpush1.bf16.msra.mxu0 %v679
    %927 = vmatprep.subr.bf16.mxu0 %v682
    %928 = vmatpush1.bf16.msra.mxu0 %v681
    %929 = vmatprep.mubr.bf16.mxu0 %v242
    %930 = vmatmul.mubr.bf16.gmra.mrb[0].mxu0 %v241
    %v931 = vpop.f32.mrb[0].mxu0
    %v932 = vadd.f32 %v889, %v931
    %v933 = vpop.f32.mrb[0].mxu0
    %v934 = vadd.f32 %v891, %v933
    %v935 = vpop.f32.mrb[0].mxu0
    %v936 = vadd.f32 %v893, %v935
    %v937 = vpop.f32.mrb[0].mxu0
    %v938 = vadd.f32 %v895, %v937
    %939 = vdwg.mxu0
    %940 = vmatprep.subr.bf16.mxu0 %v684
    %941 = vmatpush1.bf16.msra.mxu0 %v683
    %942 = vmatprep.subr.bf16.mxu0 %v686
    %943 = vmatpush1.bf16.msra.mxu0 %v685
    %944 = vmatprep.subr.bf16.mxu0 %v688
    %945 = vmatpush1.bf16.msra.mxu0 %v687
    %946 = vmatprep.subr.bf16.mxu0 %v690
    %947 = vmatpush1.bf16.msra.mxu0 %v689
    %948 = vmatprep.subr.bf16.mxu0 %v692
    %949 = vmatpush1.bf16.msra.mxu0 %v691
    %950 = vmatprep.subr.bf16.mxu0 %v694
    %951 = vmatpush1.bf16.msra.mxu0 %v693
    %952 = vmatprep.subr.bf16.mxu0 %v696
    %953 = vmatpush1.bf16.msra.mxu0 %v695
    %954 = vmatprep.subr.bf16.mxu0 %v698
    %955 = vmatpush1.bf16.msra.mxu0 %v697
    %956 = vmatprep.subr.bf16.mxu0 0
    %957 = vmatpush1.bf16.msra.mxu0 0
    %958 = vmatprep.subr.bf16.mxu0 0
    %959 = vmatpush1.bf16.msra.mxu0 0
    %960 = vmatprep.subr.bf16.mxu0 0
    %961 = vmatpush1.bf16.msra.mxu0 0
    %962 = vmatprep.subr.bf16.mxu0 0
    %963 = vmatpush1.bf16.msra.mxu0 0
    %964 = vmatprep.subr.bf16.mxu0 0
    %965 = vmatpush1.bf16.msra.mxu0 0
    %966 = vmatprep.subr.bf16.mxu0 0
    %967 = vmatpush1.bf16.msra.mxu0 0
    %968 = vmatprep.subr.bf16.mxu0 0
    %969 = vmatpush1.bf16.msra.mxu0 0
    %970 = vmatprep.subr.bf16.mxu0 0
    %971 = vmatpush1.bf16.msra.mxu0 0
    %972 = vmatprep.mubr.bf16.mxu0 0
    %973 = vmatmul.mubr.bf16.gmra.mrb[0].mxu0 %v243
    %v974 = vpop.f32.mrb[0].mxu0
    %v975 = vadd.f32 %v932, %v974
    %v976 = vpop.f32.mrb[0].mxu0
    %v977 = vadd.f32 %v934, %v976
    %v978 = vpop.f32.mrb[0].mxu0
    %v979 = vadd.f32 %v936, %v978
    %v980 = vpop.f32.mrb[0].mxu0
    %v981 = vadd.f32 %v938, %v980
    %982 = vdwg.mxu0
    %v983 = vmax.f32 %v975, 0.0
    %v984 = vmax.f32 %v977, 0.0
    %v985 = vmax.f32 %v979, 0.0
    %v986 = vmax.f32 %v981, 0.0
    %v987 = vpack.c.bf16 %v985, %v983
    %v988 = vpack.c.bf16 %v986, %v984
    %v989 = vld [vmem:[#allocation7] sm:$0xf]
    %v990 = vld [vmem:[#allocation7 + $0x4] sm:$0xf]
    %v991 = vld [vmem:[#allocation7 + $0x8] sm:$0xf]
    %v992 = vld [vmem:[#allocation7 + $0xc] sm:$0xf]
    %v993 = vld [vmem:[#allocation7 + $0x10] sm:$0xf]
    %v994 = vld [vmem:[#allocation7 + $0x14] sm:$0xf]
    %v995 = vld [vmem:[#allocation7 + $0x18] sm:$0xf]
    %v996 = vld [vmem:[#allocation7 + $0x1c] sm:$0xf]
    %v997 = vld [vmem:[#allocation7 + $0x20] sm:$0xf]
    %v998 = vld [vmem:[#allocation7 + $0x24] sm:$0xf]
    %v999 = vld [vmem:[#allocation7 + $0x28] sm:$0xf]
    %v1000 = vld [vmem:[#allocation7 + $0x2c] sm:$0xf]
    %v1001 = vld [vmem:[#allocation7 + $0x30] sm:$0xf]
    %v1002 = vld [vmem:[#allocation7 + $0x34] sm:$0xf]
    %v1003 = vld [vmem:[#allocation7 + $0x38] sm:$0xf]
    %v1004 = vld [vmem:[#allocation7 + $0x3c] sm:$0xf]
    %v1005 = vld [vmem:[#allocation7 + $0x40] sm:$0xf]
    %v1006 = vld [vmem:[#allocation7 + $0x44] sm:$0xf]
    %v1007 = vld [vmem:[#allocation7 + $0x48] sm:$0xf]
    %v1008 = vld [vmem:[#allocation7 + $0x4c] sm:$0xf]
    %v1009 = vld [vmem:[#allocation7 + $0x50] sm:$0xf]
    %v1010 = vld [vmem:[#allocation7 + $0x54] sm:$0xf]
    %v1011 = vld [vmem:[#allocation7 + $0x58] sm:$0xf]
    %v1012 = vld [vmem:[#allocation7 + $0x5c] sm:$0xf]
    %v1013 = vld [vmem:[#allocation7 + $0x60] sm:$0xf]
    %v1014 = vld [vmem:[#allocation7 + $0x64] sm:$0xf]
    %v1015 = vld [vmem:[#allocation7 + $0x68] sm:$0xf]
    %v1016 = vld [vmem:[#allocation7 + $0x6c] sm:$0xf]
    %v1017 = vld [vmem:[#allocation7 + $0x70] sm:$0xf]
    %v1018 = vld [vmem:[#allocation7 + $0x74] sm:$0xf]
    %v1019 = vld [vmem:[#allocation7 + $0x78] sm:$0xf]
    %v1020 = vld [vmem:[#allocation7 + $0x7c] sm:$0xf]
    %v1021 = vld [vmem:[%s4] sm:$0x1]
    %v1023 = vlaneseq
    %v1024 = vshrl.u32 %v1023, 7
    %v1025 = vsub.s32 0, %v1024
    %v1026 = vrot.slane %v1021, %v1025
    %v1060 = vunpack.c.l.b16 %v989
    %v1061 = vunpack.c.l.b16 %v990
    %v1062 = vunpack.c.l.b16 %v991
    %v1063 = vunpack.c.l.b16 %v992
    %v1064 = vunpack.c.l.b16 %v993
    %v1065 = vunpack.c.l.b16 %v994
    %v1066 = vunpack.c.l.b16 %v995
    %v1067 = vunpack.c.l.b16 %v996
    %v1068 = vunpack.c.l.b16 %v997
    %v1069 = vunpack.c.l.b16 %v998
    %v1070 = vunpack.c.l.b16 %v999
    %v1071 = vunpack.c.l.b16 %v1000
    %v1072 = vunpack.c.l.b16 %v1001
    %v1073 = vunpack.c.l.b16 %v1002
    %v1074 = vunpack.c.l.b16 %v1003
    %v1075 = vunpack.c.l.b16 %v1004
    %v1076 = vunpack.c.l.b16 %v1005
    %v1077 = vunpack.c.l.b16 %v1006
    %v1078 = vunpack.c.l.b16 %v1007
    %v1079 = vunpack.c.l.b16 %v1008
    %v1080 = vunpack.c.l.b16 %v1009
    %v1081 = vunpack.c.l.b16 %v1010
    %v1082 = vunpack.c.l.b16 %v1011
    %v1083 = vunpack.c.l.b16 %v1012
    %v1084 = vunpack.c.l.b16 %v1013
    %v1085 = vunpack.c.l.b16 %v1014
    %v1086 = vunpack.c.l.b16 %v1015
    %v1087 = vunpack.c.l.b16 %v1016
    %v1088 = vunpack.c.l.b16 %v1017
    %v1089 = vunpack.c.l.b16 %v1018
    %v1090 = vunpack.c.l.b16 %v1019
    %v1091 = vunpack.c.l.b16 %v1020
    %v1092 = vpack.c.b16 %v1061, %v1060
    %v1093 = vpack.c.b16 %v1063, %v1062
    %v1094 = vpack.c.b16 %v1065, %v1064
    %v1095 = vpack.c.b16 %v1067, %v1066
    %v1096 = vpack.c.b16 %v1069, %v1068
    %v1097 = vpack.c.b16 %v1071, %v1070
    %v1098 = vpack.c.b16 %v1073, %v1072
    %v1099 = vpack.c.b16 %v1075, %v1074
    %v1100 = vpack.c.b16 %v1077, %v1076
    %v1101 = vpack.c.b16 %v1079, %v1078
    %v1102 = vpack.c.b16 %v1081, %v1080
    %v1103 = vpack.c.b16 %v1083, %v1082
    %v1104 = vpack.c.b16 %v1085, %v1084
    %v1105 = vpack.c.b16 %v1087, %v1086
    %v1106 = vpack.c.b16 %v1089, %v1088
    %v1107 = vpack.c.b16 %v1091, %v1090
    %1124 = vmatprep.subr.bf16.mxu0 0
    %1125 = vmatpush1.bf16.msra.mxu0 %v1092
    %1126 = vmatprep.subr.bf16.mxu0 0
    %1127 = vmatpush1.bf16.msra.mxu0 %v1093
    %1128 = vmatprep.subr.bf16.mxu0 0
    %1129 = vmatpush1.bf16.msra.mxu0 %v1094
    %1130 = vmatprep.subr.bf16.mxu0 0
    %1131 = vmatpush1.bf16.msra.mxu0 %v1095
    %1132 = vmatprep.subr.bf16.mxu0 0
    %1133 = vmatpush1.bf16.msra.mxu0 %v1096
    %1134 = vmatprep.subr.bf16.mxu0 0
    %1135 = vmatpush1.bf16.msra.mxu0 %v1097
    %1136 = vmatprep.subr.bf16.mxu0 0
    %1137 = vmatpush1.bf16.msra.mxu0 %v1098
    %1138 = vmatprep.subr.bf16.mxu0 0
    %1139 = vmatpush1.bf16.msra.mxu0 %v1099
    %1140 = vmatprep.subr.bf16.mxu0 0
    %1141 = vmatpush1.bf16.msra.mxu0 %v1100
    %1142 = vmatprep.subr.bf16.mxu0 0
    %1143 = vmatpush1.bf16.msra.mxu0 %v1101
    %1144 = vmatprep.subr.bf16.mxu0 0
    %1145 = vmatpush1.bf16.msra.mxu0 %v1102
    %1146 = vmatprep.subr.bf16.mxu0 0
    %1147 = vmatpush1.bf16.msra.mxu0 %v1103
    %1148 = vmatprep.subr.bf16.mxu0 0
    %1149 = vmatpush1.bf16.msra.mxu0 %v1104
    %1150 = vmatprep.subr.bf16.mxu0 0
    %1151 = vmatpush1.bf16.msra.mxu0 %v1105
    %1152 = vmatprep.subr.bf16.mxu0 0
    %1153 = vmatpush1.bf16.msra.mxu0 %v1106
    %1154 = vmatprep.subr.bf16.mxu0 0
    %1155 = vmatpush1.bf16.msra.mxu0 %v1107
    %1156 = vmatprep.mubr.bf16.mxu0 %v988
    %1157 = vmatmul.mubr.bf16.gmra.mrb[0].mxu0 %v987
    %v1158 = vpop.f32.mrb[0].mxu0
    %v1159 = vadd.f32 %v1026, %v1158
    %v1160 = vpop.f32.mrb[0].mxu0
    %v1161 = vpop.f32.mrb[0].mxu0
    %v1162 = vadd.f32 %v1026, %v1161
    %v1163 = vpop.f32.mrb[0].mxu0
    %1164 = vdwg.mxu0
    %v1165 = vmax.f32 %v1159, 0.0
    %v1166 = vmax.f32 %v1162, 0.0
    %v1167 = vpack.c.bf16 %v1166, %v1165
    %v1168 = vld [vmem:[#allocation8] sm:$0xf]
    %v1169 = vld [vmem:[#allocation8 + $0x4] sm:$0xf]
    %v1170 = vld [vmem:[#allocation8 + $0x8] sm:$0xf]
    %v1171 = vld [vmem:[#allocation8 + $0xc] sm:$0xf]
    %v1172 = vld [vmem:[#allocation8 + $0x10] sm:$0xf]
    %v1173 = vld [vmem:[#allocation8 + $0x14] sm:$0xf]
    %v1174 = vld [vmem:[#allocation8 + $0x18] sm:$0xf]
    %v1175 = vld [vmem:[#allocation8 + $0x1c] sm:$0xf]
    %v1176 = vld [vmem:[#allocation8 + $0x20] sm:$0xf]
    %v1177 = vld [vmem:[#allocation8 + $0x24] sm:$0xf]
    %v1178 = vld [vmem:[#allocation8 + $0x28] sm:$0xf]
    %v1179 = vld [vmem:[#allocation8 + $0x2c] sm:$0xf]
    %v1180 = vld [vmem:[#allocation8 + $0x30] sm:$0xf]
    %v1181 = vld [vmem:[#allocation8 + $0x34] sm:$0xf]
    %v1182 = vld [vmem:[#allocation8 + $0x38] sm:$0xf]
    %v1183 = vld [vmem:[#allocation8 + $0x3c] sm:$0xf]
    %v1184 = vld [vmem:[%s6] sm:$0x1]
    %v1186 = vlaneseq
    %v1187 = vshrl.u32 %v1186, 7
    %v1188 = vsub.s32 0, %v1187
    %v1189 = vrot.slane %v1184, %v1188
    %v1207 = vunpack.c.l.b16 %v1168
    %v1208 = vunpack.c.l.b16 %v1169
    %v1209 = vunpack.c.l.b16 %v1170
    %v1210 = vunpack.c.l.b16 %v1171
    %v1211 = vunpack.c.l.b16 %v1172
    %v1212 = vunpack.c.l.b16 %v1173
    %v1213 = vunpack.c.l.b16 %v1174
    %v1214 = vunpack.c.l.b16 %v1175
    %v1215 = vunpack.c.l.b16 %v1176
    %v1216 = vunpack.c.l.b16 %v1177
    %v1217 = vunpack.c.l.b16 %v1178
    %v1218 = vunpack.c.l.b16 %v1179
    %v1219 = vunpack.c.l.b16 %v1180
    %v1220 = vunpack.c.l.b16 %v1181
    %v1221 = vunpack.c.l.b16 %v1182
    %v1222 = vunpack.c.l.b16 %v1183
    %v1223 = vpack.c.b16 %v1208, %v1207
    %v1224 = vpack.c.b16 %v1210, %v1209
    %v1225 = vpack.c.b16 %v1212, %v1211
    %v1226 = vpack.c.b16 %v1214, %v1213
    %v1227 = vpack.c.b16 %v1216, %v1215
    %v1228 = vpack.c.b16 %v1218, %v1217
    %v1229 = vpack.c.b16 %v1220, %v1219
    %v1230 = vpack.c.b16 %v1222, %v1221
    %1239 = vmatprep.subr.bf16.mxu0 0
    %1240 = vmatpush1.bf16.msra.mxu0 %v1223
    %1241 = vmatprep.subr.bf16.mxu0 0
    %1242 = vmatpush1.bf16.msra.mxu0 %v1224
    %1243 = vmatprep.subr.bf16.mxu0 0
    %1244 = vmatpush1.bf16.msra.mxu0 %v1225
    %1245 = vmatprep.subr.bf16.mxu0 0
    %1246 = vmatpush1.bf16.msra.mxu0 %v1226
    %1247 = vmatprep.subr.bf16.mxu0 0
    %1248 = vmatpush1.bf16.msra.mxu0 %v1227
    %1249 = vmatprep.subr.bf16.mxu0 0
    %1250 = vmatpush1.bf16.msra.mxu0 %v1228
    %1251 = vmatprep.subr.bf16.mxu0 0
    %1252 = vmatpush1.bf16.msra.mxu0 %v1229
    %1253 = vmatprep.subr.bf16.mxu0 0
    %1254 = vmatpush1.bf16.msra.mxu0 %v1230
    %1255 = vmatprep.subr.bf16.mxu0 0
    %1256 = vmatpush1.bf16.msra.mxu0 0
    %1257 = vmatprep.subr.bf16.mxu0 0
    %1258 = vmatpush1.bf16.msra.mxu0 0
    %1259 = vmatprep.subr.bf16.mxu0 0
    %1260 = vmatpush1.bf16.msra.mxu0 0
    %1261 = vmatprep.subr.bf16.mxu0 0
    %1262 = vmatpush1.bf16.msra.mxu0 0
    %1263 = vmatprep.subr.bf16.mxu0 0
    %1264 = vmatpush1.bf16.msra.mxu0 0
    %1265 = vmatprep.subr.bf16.mxu0 0
    %1266 = vmatpush1.bf16.msra.mxu0 0
    %1267 = vmatprep.subr.bf16.mxu0 0
    %1268 = vmatpush1.bf16.msra.mxu0 0
    %1269 = vmatprep.subr.bf16.mxu0 0
    %1270 = vmatpush1.bf16.msra.mxu0 0
    %1271 = vmatprep.mubr.bf16.mxu0 0
    %1272 = vmatmul.mubr.bf16.gmra.mrb[0].mxu0 %v1167
    %v1273 = vpop.f32.mrb[0].mxu0
    %v1274 = vadd.f32 %v1189, %v1273
    %v1275 = vpop.f32.mrb[0].mxu0
    %v1276 = vpop.f32.mrb[0].mxu0
    %v1277 = vadd.f32 %v1189, %v1276
    %v1278 = vpop.f32.mrb[0].mxu0
    %1279 = vdwg.mxu0
    %1280 = vmax.xlane.f32.xlu0 %v1274
    %v1281 = vpop.xlane.xlu0 %1280
    %1282 = vmax.xlane.f32.xlu0 %v1277
    %v1283 = vpop.xlane.xlu0 %1282
    %v1284 = vsub.f32 %v1274, %v1281
    %v1285 = vsub.f32 %v1277, %v1283
    %v1286 = vmul.f32 %v1284, 1.442695
    %v1287 = vpow.pop %v1286
    %v1288 = vmul.f32 %v1285, 1.442695
    %v1289 = vpow.pop %v1288
    %1290 = vadd.xlane.f32.xlu0 %v1287
    %v1291 = vpop.xlane.xlu0 %1290
    %1292 = vadd.xlane.f32.xlu0 %v1289
    %v1293 = vpop.xlane.xlu0 %1292
    %v1294 = vlog2.pop %v1291
    %v1295 = vmul.f32 %v1294, 0.6931472
    %v1296 = vlog2.pop %v1293
    %v1297 = vmul.f32 %v1296, 0.6931472
    %v1298 = vsub.f32 %v1284, %v1295
    %v1299 = vsub.f32 %v1285, %v1297
    %1300 = vst [vmem:[#allocation10] sm:$0xff] %v1298
    %1301 = vst [vmem:[#allocation10 + $0x8] sm:$0xff] %v1299
    // Predicated region
    $region46: #{tpu_custom_call.1} parent=1 // pred_check
      _
    $region47: #{tpu_custom_call.1} parent=1 // pred_check_branch
      %1303 = sbr.rel (0) target = $region49
    $region48: #{tpu_custom_call.1} parent=1 // pred_region
      %s1305 = ssub.s32 256, 256
      %1306 = vsyncadd [#allocation4], %s1305
      %s1307 = sshll.u32 [#allocation10], 4
      %s1308 = int_to_ptr.vmem [resolvable:$true] %s1307
      %1313 = dma.vmem_to_hbm [thread:$0]  %s1308, 256, %s7, [#allocation4], 128, 128, 8
    $region49: #{tpu_custom_call.1} parent=1 // pred_fallthru
      _
    // Predicated region
    $region50: #{tpu_custom_call.1} parent=1 // pred_check
      _
    $region51: #{tpu_custom_call.1} parent=1 // pred_check_branch
      %1315 = sbr.rel (0) target = $region53
    $region52: #{tpu_custom_call.1} parent=1 // pred_region
      %1316 = dma.done [#allocation4], 256
    $region53: #{tpu_custom_call.1} parent=1 // pred_fallthru
      _
    %1317 = vsyncpa [#allocation3], 1
    %1318 = vsyncpa [#allocation6], 1
    %1319 = vsyncpa [#allocation9], 1
    %1320 = vsyncpa [#allocation4], 1

</llo_original>
